<compile_context>
chip_gen: v5e
topology: v5e:2x2
jax: 0.10.0
libtpu: 0.0.40
codegen_flags: <defaults>
</compile_context>

<pallas_src>
import functools

import jax
import jax.numpy as jnp
from jax.experimental import pallas as pl
from jax.experimental.pallas import tpu as pltpu

_EPS = 1e-6
_LANES = 128
_ROW_QUANTUM = 16                     # safe sublane packing for f32 & bf16
_QUANTUM = _ROW_QUANTUM * _LANES      # 2048-element flat alignment
_CHUNK_ROWS = 2048                    # in-kernel sub-slice (~1 MiB f32 values)


def _tpu_generation():
    """Best-effort TPU generation from the device kind (0 if unknown)."""
    try:
        kind = jax.devices()[0].device_kind.lower()
    except Exception:
        return 0
    for g in (7, 6, 5, 4, 3, 2):
        if str(g) in kind:
            return g
    return 0


def _sumsq_kernel(x_ref, y_ref, o_ref, *, tile_rows, chunk_rows, acc_rows,
                  blocks_per_core, full_blocks, rows_valid, needs_mask):
    """Accumulates per-core partial sums of (x - y)^2 into o_ref (acc_rows, 128)."""
    i = pl.program_id(1)

    @pl.when(i == 0)
    def _init():
        o_ref[...] = jnp.zeros_like(o_ref)

    n_sub = tile_rows // chunk_rows
    n_fold = chunk_rows // acc_rows

    def _accum(mask_base=None):
        # Unrolled loop over <=2048-row sub-slices of the DMA block: keeps
        # vector values small while the block (and DMA) stays big.
        for s in range(n_sub):
            r0 = s * chunk_rows
            xd = x_ref[pl.ds(r0, chunk_rows), :].astype(jnp.float32)
            yd = y_ref[pl.ds(r0, chunk_rows), :].astype(jnp.float32)
            d = xd - yd
            sq = d * d
            if mask_base is not None:
                # Only the final partial / clamped-duplicate block pays this.
                # (int32 row index: fine below ~2^31 rows.)
                row = jax.lax.broadcasted_iota(jnp.int32, sq.shape, 0)
                sq = jnp.where(mask_base + r0 + row < rows_valid, sq, 0.0)
            # (chunk_rows, 128) -> (acc_rows, 128) with plain vreg adds; the
            # expensive cross-lane reduce happens once, in the JAX epilogue.
            o_ref[...] += jnp.sum(sq.reshape(n_fold, acc_rows, _LANES), axis=0)

    if not needs_mask:
        _accum()
    else:
        c = pl.program_id(0)
        logical_block = c * blocks_per_core + i

        @pl.when(logical_block < full_blocks)
        def _fast():                       # unmasked hot path
            _accum()

        @pl.when(logical_block >= full_blocks)
        def _tail():                       # partial last block / duplicate
            _accum(mask_base=logical_block * tile_rows)


def rmse_loss(x, y):
    """sqrt(mean((x - y)^2) + 1e-6), matching the PyTorch RMSELoss recipe."""
    assert x.shape == y.shape, "x and y must have identical shapes"
    n = x.size
    if n == 0:
        return jnp.sqrt(jnp.float32(_EPS))

    xf = jnp.ravel(x)
    yf = jnp.ravel(y)

    n_main = (n // _QUANTUM) * _QUANTUM
    total = jnp.float32(0.0)
    itemsize = max(jnp.dtype(x.dtype).itemsize, jnp.dtype(y.dtype).itemsize)

    if n_main:
        rows = n_main // _LANES            # multiple of 16
        gen = _tpu_generation()

        # Dtype-aware block size: ~4 MiB/input buffer on v6e/v7x, ~2 MiB on
        # v5e / unknown chips (smaller default scoped VMEM, slower HBM).
        target_buf_bytes = (4 << 20) if gen >= 6 else (2 << 20)
        max_tile_rows = max(_CHUNK_ROWS, target_buf_bytes // (_LANES * itemsize))

        if rows <= _CHUNK_ROWS:
            tile_rows = rows
            chunk_rows = rows
        else:
            tile_rows = min(max_tile_rows, (rows // _CHUNK_ROWS) * _CHUNK_ROWS)
            chunk_rows = _CHUNK_ROWS

        nblocks = -(-rows // tile_rows)
        # 2-way split only where there are 2 TensorCores (v7x); on 1-TC chips
        # the parallel axis is just a serial loop plus wasted clamped DMAs.
        num_split = 2 if gen >= 7 else 1
        num_split = max(1, min(num_split, nblocks))
        blocks_per_core = -(-nblocks // num_split)

        full_blocks = rows // tile_rows
        needs_mask = num_split * blocks_per_core * tile_rows > rows
        clamp_blocks = num_split * blocks_per_core > nblocks

        # Widest accumulator dividing the sub-slice (8-way ILP at 64 rows).
        acc_rows = _ROW_QUANTUM
        for cand in (64, 32, 16):
            if chunk_rows % cand == 0:
                acc_rows = cand
                break

        x2d = xf[:n_main].reshape(rows, _LANES)
        y2d = yf[:n_main].reshape(rows, _LANES)

        def _row_block(c, i):
            b = c * blocks_per_core + i
            if clamp_blocks:
                # Keep the DMA in-bounds; the in-kernel mask zeroes that data.
                b = jnp.minimum(b, nblocks - 1)
            return b

        in_spec = pl.BlockSpec((tile_rows, _LANES),
                               lambda c, i: (_row_block(c, i), 0))

        kernel = functools.partial(
            _sumsq_kernel,
            tile_rows=tile_rows,
            chunk_rows=chunk_rows,
            acc_rows=acc_rows,
            blocks_per_core=blocks_per_core,
            full_blocks=full_blocks,
            rows_valid=rows,
            needs_mask=needs_mask,
        )

        out_bytes = num_split * acc_rows * _LANES * 4

        partials = pl.pallas_call(
            kernel,
            out_shape=jax.ShapeDtypeStruct((num_split, acc_rows, _LANES),
                                           jnp.float32),
            grid_spec=pltpu.PrefetchScalarGridSpec(
                num_scalar_prefetch=0,
                grid=(num_split, blocks_per_core),
                in_specs=[in_spec, in_spec],
                out_specs=pl.BlockSpec((None, acc_rows, _LANES),
                                       lambda c, i: (c, 0, 0)),
            ),
            compiler_params=pltpu.CompilerParams(
                # TODO(synk): if an xprof on v7x shows only one TC busy, switch
                # the leading axis to pltpu.CORE_PARALLEL.
                dimension_semantics=("parallel", "arbitrary"),
                vmem_limit_bytes=32 * 1024 * 1024,
            ),
            cost_estimate=pl.CostEstimate(
                flops=3 * n_main,
                transcendentals=0,
                bytes_accessed=2 * n_main * itemsize + out_bytes,
            ),
        )(x2d, y2d)

        total = jnp.sum(partials, dtype=jnp.float32)

    # Flat tail (< 2048 elements): tiny JAX epilogue instead of a full padded
    # HBM copy of both inputs.
    if n_main < n:
        dt = xf[n_main:].astype(jnp.float32) - yf[n_main:].astype(jnp.float32)
        total = total + jnp.sum(dt * dt, dtype=jnp.float32)

    mse = total / jnp.float32(n)
    return jnp.sqrt(mse + jnp.float32(_EPS))


def _ref_rmse(x, y):
    d = x.astype(jnp.float32) - y.astype(jnp.float32)
    return jnp.sqrt(jnp.mean(d * d) + jnp.float32(_EPS))


if __name__ == "__main__":
    key = jax.random.PRNGKey(0)
    kx, ky = jax.random.split(key)
    loss_fn = jax.jit(rmse_loss)

    def _check(xa, ya, name):
        out = jax.block_until_ready(loss_fn(xa, ya))
        ref = _ref_rmse(xa, ya)
        assert jnp.allclose(out, ref, rtol=1e-5, atol=1e-6), (name, out, ref)

    # Primary check: small NCHW-like inputs consistent with a conv-output loss.
    x = jax.random.normal(kx, (2, 4, 16, 16), dtype=jnp.float32)
    y = jax.random.normal(ky, (2, 4, 16, 16), dtype=jnp.float32)
    _check(x, y, "f32 small")

    # Native-dtype streaming path (bf16 in, f32 math inside the kernel).
    _check(x.astype(jnp.bfloat16), y.astype(jnp.bfloat16), "bf16 small")

    # Unaligned element count below one 2048-element quantum (pure epilogue).
    x2 = jax.random.normal(kx, (2, 3, 5, 7), dtype=jnp.float32)
    y2 = jax.random.normal(ky, (2, 3, 5, 7), dtype=jnp.float32)
    _check(x2, y2, "tiny unaligned")

    # Multi-block path: exercises the large dtype-aware blocks, the guarded
    # last-block mask, the flat-tail epilogue and (on 2-TC chips) the clamped
    # duplicate block of the 2-way split.
    x3 = jax.random.normal(kx, (2176, 1030), dtype=jnp.float32)
    y3 = jax.random.normal(ky, (2176, 1030), dtype=jnp.float32)
    _check(x3, y3, "multi-block")

    print("KERNEL_OK")
</pallas_src>

<mosaic_0001>
module attributes {stable_mosaic.version = 11 : i64} {
  func.func @_sumsq_kernel(%arg0: i32, %arg1: i32, %arg2: memref<16x128xf32, #tpu.memory_space<vmem>>, %arg3: memref<16x128xf32, #tpu.memory_space<vmem>>, %arg4: memref<1x16x128xf32, #tpu.memory_space<vmem>>) attributes {dimension_semantics = [#tpu.dimension_semantics<parallel>, #tpu.dimension_semantics<arbitrary>], iteration_bounds = array<i64: 1, 1>, scalar_prefetch = 0 : i64, scratch_operands = 0 : i64, tpu.core_type = #tpu.core_type<tc>, window_params = [{transform_indices = @transform_0, window_bounds = array<i64: 16, 128>}, {transform_indices = @transform_1, window_bounds = array<i64: 16, 128>}, {transform_indices = @transform_2, window_bounds = array<i64: 1, 16, 128>}]} {
    %c0_i32 = arith.constant 0 : i32
    %0 = arith.cmpi eq, %arg1, %c0_i32 : i32
    %1 = arith.extui %0 : i1 to i32
    %c0_i32_0 = arith.constant 0 : i32
    %2 = arith.cmpi ne, %1, %c0_i32_0 : i32
    scf.if %2 {
      %cst_10 = arith.constant 0.000000e+00 : f32
      %15 = vector.broadcast %cst_10 : f32 to vector<16x128xf32>
      %c0_11 = arith.constant 0 : index
      %c0_12 = arith.constant 0 : index
      %c0_13 = arith.constant 0 : index
      %16 = vector.load %arg4[%c0_11, %c0_12, %c0_13] : memref<1x16x128xf32, #tpu.memory_space<vmem>>, vector<1x16x128xf32>
      %17 = vector.shape_cast %16 : vector<1x16x128xf32> to vector<16x128xf32>
      %18 = vector.shape_cast %15 : vector<16x128xf32> to vector<1x16x128xf32>
      tpu.vector_store %arg4[%c0_11, %c0_12, %c0_13], %18 {strides = array<i32>} : memref<1x16x128xf32, #tpu.memory_space<vmem>>, vector<1x16x128xf32>,
    } else {
    }
    %c0 = arith.constant 0 : index
    %c0_1 = arith.constant 0 : index
    %3 = vector.load %arg2[%c0, %c0_1] : memref<16x128xf32, #tpu.memory_space<vmem>>, vector<16x128xf32>
    %c0_2 = arith.constant 0 : index
    %c0_3 = arith.constant 0 : index
    %4 = vector.load %arg3[%c0_2, %c0_3] : memref<16x128xf32, #tpu.memory_space<vmem>>, vector<16x128xf32>
    %5 = arith.subf %3, %4 : vector<16x128xf32>
    %6 = arith.mulf %5, %5 : vector<16x128xf32>
    %c0_4 = arith.constant 0 : index
    %c0_5 = arith.constant 0 : index
    %c0_6 = arith.constant 0 : index
    %7 = vector.load %arg4[%c0_4, %c0_5, %c0_6] : memref<1x16x128xf32, #tpu.memory_space<vmem>>, vector<1x16x128xf32>
    %8 = vector.shape_cast %7 : vector<1x16x128xf32> to vector<16x128xf32>
    %9 = vector.shape_cast %6 : vector<16x128xf32> to vector<1x16x128xf32>
    %cst = arith.constant dense<0.000000e+00> : vector<16x128xf32>
    %10 = vector.multi_reduction <add>, %9, %cst [0] : vector<1x16x128xf32> to vector<16x128xf32>
    %11 = arith.addf %8, %10 : vector<16x128xf32>
    %c0_7 = arith.constant 0 : index
    %c0_8 = arith.constant 0 : index
    %c0_9 = arith.constant 0 : index
    %12 = vector.load %arg4[%c0_7, %c0_8, %c0_9] : memref<1x16x128xf32, #tpu.memory_space<vmem>>, vector<1x16x128xf32>
    %13 = vector.shape_cast %12 : vector<1x16x128xf32> to vector<16x128xf32>
    %14 = vector.shape_cast %11 : vector<16x128xf32> to vector<1x16x128xf32>
    tpu.vector_store %arg4[%c0_7, %c0_8, %c0_9], %14 {strides = array<i32>} : memref<1x16x128xf32, #tpu.memory_space<vmem>>, vector<1x16x128xf32>,
    return
  }
  func.func @transform_0(%arg0: i32, %arg1: i32) -> (i32, i32) {
    %c1_i32 = arith.constant 1 : i32
    %0 = arith.muli %arg0, %c1_i32 : i32
    %1 = arith.addi %0, %arg1 : i32
    %c0_i32 = arith.constant 0 : i32
    %c0_i32_0 = arith.constant 0 : i32
    return %1, %c0_i32 : i32, i32
  }
  func.func @transform_1(%arg0: i32, %arg1: i32) -> (i32, i32) {
    %c1_i32 = arith.constant 1 : i32
    %0 = arith.muli %arg0, %c1_i32 : i32
    %1 = arith.addi %0, %arg1 : i32
    %c0_i32 = arith.constant 0 : i32
    %c0_i32_0 = arith.constant 0 : i32
    return %1, %c0_i32 : i32, i32
  }
  func.func @transform_2(%arg0: i32, %arg1: i32) -> (i32, i32, i32) {
    %c0_i32 = arith.constant 0 : i32
    %c0_i32_0 = arith.constant 0 : i32
    %c0_i32_1 = arith.constant 0 : i32
    return %arg0, %c0_i32, %c0_i32_0 : i32, i32, i32
  }
}

</mosaic_0001>

<llo_original>
// kernel: rmse_loss.1
$region0: #{rmse_loss.1}
  #allocation0 [shape = 'u32[]', space=smem, size = 0x4, offset = 0x4, fixed_abs, tag = 'smem constant byte address 0x4 - core index']
  #allocation1 [shape = 'u32[72,128]{1,0:T(1,128)}', space=vmem, size = 0x9000, scoped, tag = 'internal scratch']
  %s0 = inlined_call_operand.vmem [shape: f32[16,128], index: 0, kind: input, shape index: {}]
  %s1 = inlined_call_operand.vmem [shape: f32[16,128], index: 1, kind: input, shape index: {}]
  %s2 = inlined_call_operand.vmem [shape: f32[1,16,128], index: 2, kind: output, shape index: {}]
  %s3 = sld [smem:[#allocation0]]
  $region22: #{rmse_loss.1} parent=0
    _
  %s5 = ssub.s32 1, %s3
  %s6 = scalar_select 0, %s5, %s3
  // Predicated region
  $region2: #{rmse_loss.1} parent=0 // pred_check
    _
  $region3: #{rmse_loss.1} parent=0 // pred_check_branch
    %8 = sbr.rel (0) target = $region5
  $region4: #{rmse_loss.1} parent=0 // pred_region
    %s9 = sadd.s32 0, 0
    %s10 = smul.u32 2, %s9
    %p11 = scmp.lt.s32.totalorder %s10, 1
    %s12 = scalar_select %p11, %s10, 1
    %s13 = smul.addr %s12, 8
    %s14 = scalar_lea.vmem %s0, %s13
    %s15 = sadd.s32 0, 0
    %s16 = smul.u32 2, %s15
  $region5: #{rmse_loss.1} parent=0 // pred_fallthru
    _
  // Predicated region
  $region6: #{rmse_loss.1} parent=0 // pred_check
    _
  $region7: #{rmse_loss.1} parent=0 // pred_check_branch
    %18 = sbr.rel (0) target = $region9
  $region8: #{rmse_loss.1} parent=0 // pred_region
    %s19 = sadd.s32 0, 0
    %s20 = smul.u32 2, %s19
    %p21 = scmp.lt.s32.totalorder %s20, 1
    %s22 = scalar_select %p21, %s20, 1
    %s23 = smul.addr %s22, 8
    %s24 = scalar_lea.vmem %s1, %s23
    %s25 = sadd.s32 0, 0
    %s26 = smul.u32 2, %s25
  $region9: #{rmse_loss.1} parent=0 // pred_fallthru
    _
  %s27 = sadd.s32 0, 0
  %s28 = smul.u32 2, %s27
  %p29 = scmp.lt.s32.totalorder %s28, 1
  %s30 = scalar_select %p29, %s28, 1
  %s31 = smul.addr %s30, 8
  %s32 = scalar_lea.vmem %s0, %s31
  %s33 = sadd.s32 0, 0
  %s34 = smul.u32 2, %s33
  %p35 = scmp.lt.s32.totalorder %s34, 1
  %s36 = scalar_select %p35, %s34, 1
  %s37 = smul.addr %s36, 8
  %s38 = scalar_lea.vmem %s1, %s37
  %s39 = sadd.s32 0, 0
  %s40 = smul.u32 2, %s39
  %p41 = scmp.lt.s32.totalorder %s40, 1
  %s42 = scalar_select %p41, %s40, 1
  %s43 = smul.addr %s42, 8
  %s44 = scalar_lea.vmem %s0, %s43
  %s45 = sadd.s32 0, 0
  %s46 = smul.u32 2, %s45
  %s47 = sadd.s32 0, 0
  %s48 = smul.u32 2, %s47
  %p49 = scmp.lt.s32.totalorder %s48, 1
  %s50 = scalar_select %p49, %s48, 1
  %s51 = smul.addr %s50, 8
  %s52 = scalar_lea.vmem %s1, %s51
  %s53 = sadd.s32 0, 0
  %s54 = smul.u32 2, %s53
  %p55 = scmp.eq.s32.totalorder 0, 0
  // Predicated region
  $region10: #{rmse_loss.1} parent=0 // pred_check
    %p56 = pneg %p55
  $region11: #{rmse_loss.1} parent=0 // pred_check_branch
    %58 = sbr.rel (%p56) target = $region13
  $region12: #{rmse_loss.1} parent=0 // pred_region
    %59 = vst [vmem:[%s2] sm:$0xff] 0.0
    %60 = vst [vmem:[%s2 + $0x8] sm:$0xff] 0.0
  $region13: #{rmse_loss.1} parent=0 // pred_fallthru
    _
  %v61 = vld [vmem:[%s44] sm:$0xff]
  %v62 = vld [vmem:[%s44 + $0x8] sm:$0xff]
  %v63 = vld [vmem:[%s52] sm:$0xff]
  %v64 = vld [vmem:[%s52 + $0x8] sm:$0xff]
  %v65 = vsub.f32 %v61, %v63
  %v66 = vsub.f32 %v62, %v64
  %v67 = vmul.f32 %v65, %v65
  %v68 = vmul.f32 %v66, %v66
  %v69 = vld [vmem:[%s2] sm:$0xff]
  %v70 = vld [vmem:[%s2 + $0x8] sm:$0xff]
  %v71 = vadd.f32 %v67, 0.0
  %v72 = vadd.f32 %v68, 0.0
  %v73 = vadd.f32 %v69, %v71
  %v74 = vadd.f32 %v70, %v72
  %75 = vst [vmem:[%s2] sm:$0xff] %v73
  %76 = vst [vmem:[%s2 + $0x8] sm:$0xff] %v74
  // Predicated region
  $region14: #{rmse_loss.1} parent=0 // pred_check
    _
  $region15: #{rmse_loss.1} parent=0 // pred_check_branch
    %78 = sbr.rel (0) target = $region17
  $region16: #{rmse_loss.1} parent=0 // pred_region
    _
  $region17: #{rmse_loss.1} parent=0 // pred_fallthru
    _
  // Predicated region
  $region18: #{rmse_loss.1} parent=0 // pred_check
    _
  $region19: #{rmse_loss.1} parent=0 // pred_check_branch
    %80 = sbr.rel (0) target = $region21
  $region20: #{rmse_loss.1} parent=0 // pred_region
    _
  $region21: #{rmse_loss.1} parent=0 // pred_fallthru
    _

</llo_original>
